<compile_context>
chip_gen: v6e
topology: v6e:2x2x1
jax: 0.10.0
libtpu: 0.0.40
codegen_flags: <defaults>
</compile_context>

<pallas_src>
import functools

import jax
import jax.numpy as jnp
from jax.experimental import pallas as pl
from jax.experimental.pallas import tpu as pltpu


def ldrpm_kernel(x_ref, wt_ref, aux_ref, out_ref, *, approx_reciprocal):
    # MXU matmul: bf16 operands, f32 accumulation.
    x_eq = jnp.dot(x_ref[...], wt_ref[...], preferred_element_type=jnp.float32)

    aux = aux_ref[...]            # (3, D) f32: [eq_bias; x_LDR; nonneg_mask]
    bias = aux[0:1, :]
    x_ldr = aux[1:2, :]
    nn_mask = aux[2:3, :]

    x_eq = x_eq + bias            # broadcast over rows

    eps = jnp.finfo(jnp.float32).eps
    # s = (x_LDR - x_eq).clamp_min(eps)
    s = jnp.maximum(x_ldr - x_eq, eps)
    # alphas = -x_eq / s  (reciprocal-multiply; approx=True uses the EUP slot)
    alphas = -x_eq * pl.reciprocal(s, approx=approx_reciprocal)

    # mask = (x_eq < 0) & nonnegative_mask ; masked_alphas = alphas * mask
    mask = (x_eq < 0.0) & (nn_mask > 0.0)
    masked_alphas = jnp.where(mask, alphas, 0.0)

    # alpha = max over the feature dim                       -> (tb, 1)
    alpha = jnp.max(masked_alphas, axis=-1, keepdims=True)

    # x_star = x_LDR * alpha + x_eq * (1 - alpha)
    out_ref[...] = x_ldr * alpha + x_eq * (1.0 - alpha)


def prepare_ldrpm_params(eq_weight, eq_bias_transform, b_src, ldr_bias,
                         nonnegative_mask):
    """One-time parameter prep (hoisted out of the per-call path).

    Mirrors Projector.__init__ (stores weight.t()) and Projector.update_bias
    (bias = b @ bias_transform.t()).
    """
    wt = eq_weight.T.astype(jnp.bfloat16)                       # (D, D) bf16
    eq_bias = (b_src @ eq_bias_transform.T).astype(jnp.float32)  # (D,)
    aux = jnp.stack(
        [eq_bias,
         ldr_bias.astype(jnp.float32),
         nonnegative_mask.astype(jnp.float32)],
        axis=0)                                                  # (3, D) f32
    return wt, aux


@functools.partial(jax.jit, static_argnames=("tb", "approx_reciprocal"))
def ldrpm_forward(x, wt, aux, *, tb=128, approx_reciprocal=False):
    B, D = x.shape
    tb = min(tb, B)
    assert B % tb == 0 and tb % 8 == 0, "row tile must divide B and be 8-aligned"
    grid = (B // tb,)

    x_lp = x.astype(jnp.bfloat16)   # halve x HBM traffic; accum stays f32

    kernel = functools.partial(ldrpm_kernel,
                               approx_reciprocal=approx_reciprocal)

    # TODO(synk): for large D, tile the (D, D) weight over a K ("arbitrary")
    # grid axis with a VMEM f32 accumulator instead of keeping it resident,
    # to stay within v7x's 64 MiB VMEM.
    return pl.pallas_call(
        kernel,
        out_shape=jax.ShapeDtypeStruct((B, D), jnp.float32),
        grid_spec=pltpu.PrefetchScalarGridSpec(
            num_scalar_prefetch=0,
            grid=grid,
            in_specs=[
                pl.BlockSpec((tb, D), lambda i: (i, 0)),   # x tile (bf16)
                pl.BlockSpec((D, D), lambda i: (0, 0)),    # eq_weight.T (bf16, grid-invariant)
                pl.BlockSpec((3, D), lambda i: (0, 0)),    # packed [bias; x_LDR; mask]
            ],
            out_specs=pl.BlockSpec((tb, D), lambda i: (i, 0)),
        ),
        compiler_params=pltpu.CompilerParams(
            dimension_semantics=("parallel",)),
    )(x_lp, wt, aux)


def ldrpm_reference(x, eq_weight, eq_bias, x_ldr, nonneg_mask,
                    *, matmul_dtype=jnp.float32):
    """Pure-JAX reference (matmul_dtype lets us match the kernel's bf16 MXU path)."""
    x_eq = jnp.dot(x.astype(matmul_dtype), eq_weight.T.astype(matmul_dtype),
                   preferred_element_type=jnp.float32) + eq_bias
    eps = jnp.finfo(jnp.float32).eps
    s = jnp.maximum(x_ldr - x_eq, eps)
    alphas = -x_eq / s
    mask = (x_eq < 0) & nonneg_mask.astype(bool)
    masked_alphas = alphas * mask
    alpha = jnp.max(masked_alphas, axis=-1)
    return x_ldr * alpha[:, None] + x_eq * (1.0 - alpha)[:, None]


if __name__ == "__main__":
    B, D, M = 256, 128, 32                   # batch, feature dim, bias-source dim
    key = jax.random.PRNGKey(0)
    k_x, k_w, k_bt, k_b, k_ldrb, k_m = jax.random.split(key, 6)

    # Deterministic synthetic parameters (shapes as implied by LDRPM.__init__).
    x = jax.random.normal(k_x, (B, D), dtype=jnp.float32)
    eq_weight = jax.random.normal(k_w, (D, D), dtype=jnp.float32) * 0.1
    eq_bias_transform = jax.random.normal(k_bt, (D, M), dtype=jnp.float32) * 0.1
    b_src = jax.random.normal(k_b, (M,), dtype=jnp.float32)
    ldr_bias = jax.random.normal(k_ldrb, (D,), dtype=jnp.float32)     # x_LDR
    nonnegative_mask = (jax.random.uniform(k_m, (D,)) > 0.5)
    # ldr_weight / ldr_temp are unused in LDRPM.forward (ldr_projector is only
    # exercised via update_ldr_ref, which is not part of forward).

    # One-time parameter preparation (transpose / casts / bias = b @ T.T / packing).
    wt, aux = prepare_ldrpm_params(eq_weight, eq_bias_transform, b_src,
                                   ldr_bias, nonnegative_mask)

    out = ldrpm_forward(x, wt, aux, tb=128, approx_reciprocal=False)
    jax.block_until_ready(out)

    # Reference with the same bf16 matmul inputs the kernel uses.
    eq_bias = b_src @ eq_bias_transform.T
    ref = ldrpm_reference(x, eq_weight, eq_bias, ldr_bias, nonnegative_mask,
                          matmul_dtype=jnp.bfloat16)
    assert jnp.allclose(out, ref, atol=1e-4, rtol=1e-3), "mismatch vs reference"

    print("KERNEL_OK")
</pallas_src>

<mosaic_0001>
module attributes {stable_mosaic.version = 11 : i64} {
  func.func @ldrpm_kernel(%arg0: i32, %arg1: memref<128x128xbf16, #tpu.memory_space<vmem>>, %arg2: memref<128x128xbf16, #tpu.memory_space<vmem>>, %arg3: memref<3x128xf32, #tpu.memory_space<vmem>>, %arg4: memref<128x128xf32, #tpu.memory_space<vmem>>) attributes {dimension_semantics = [#tpu.dimension_semantics<parallel>], iteration_bounds = array<i64: 2>, scalar_prefetch = 0 : i64, scratch_operands = 0 : i64, tpu.core_type = #tpu.core_type<tc>, window_params = [{transform_indices = @transform_0, window_bounds = array<i64: 128, 128>}, {pipeline_mode = #tpu.pipeline_mode<synchronous>, transform_indices = @transform_1, window_bounds = array<i64: 128, 128>}, {pipeline_mode = #tpu.pipeline_mode<synchronous>, transform_indices = @transform_2, window_bounds = array<i64: 3, 128>}, {transform_indices = @transform_3, window_bounds = array<i64: 128, 128>}]} {
    %c0 = arith.constant 0 : index
    %c0_0 = arith.constant 0 : index
    %0 = vector.load %arg1[%c0, %c0_0] : memref<128x128xbf16, #tpu.memory_space<vmem>>, vector<128x128xbf16>
    %c0_1 = arith.constant 0 : index
    %c0_2 = arith.constant 0 : index
    %1 = vector.load %arg2[%c0_1, %c0_2] : memref<128x128xbf16, #tpu.memory_space<vmem>>, vector<128x128xbf16>
    %cst = arith.constant dense<0.000000e+00> : vector<128x128xf32>
    %2 = tpu.matmul %0, %1, %cst {dimension_numbers = #tpu.dot_dimension_numbers<[1], [0], [0], [1], [0, 0, 1, 1], [], []>} : vector<128x128xbf16>, vector<128x128xbf16>, vector<128x128xf32> -> vector<128x128xf32>
    %c0_3 = arith.constant 0 : index
    %c0_4 = arith.constant 0 : index
    %3 = vector.load %arg3[%c0_3, %c0_4] : memref<3x128xf32, #tpu.memory_space<vmem>>, vector<3x128xf32>
    %4 = vector.extract_strided_slice %3 {offsets = [0, 0], sizes = [1, 128], strides = [1, 1]} : vector<3x128xf32> to vector<1x128xf32>
    %5 = vector.extract_strided_slice %3 {offsets = [1, 0], sizes = [1, 128], strides = [1, 1]} : vector<3x128xf32> to vector<1x128xf32>
    %6 = vector.extract_strided_slice %3 {offsets = [2, 0], sizes = [1, 128], strides = [1, 1]} : vector<3x128xf32> to vector<1x128xf32>
    %7 = vector.broadcast %4 : vector<1x128xf32> to vector<128x128xf32>
    %8 = arith.addf %2, %7 : vector<128x128xf32>
    %9 = vector.broadcast %5 : vector<1x128xf32> to vector<128x128xf32>
    %10 = arith.subf %9, %8 : vector<128x128xf32>
    %cst_5 = arith.constant 1.1920929E-7 : f32
    %11 = vector.broadcast %cst_5 : f32 to vector<128x128xf32>
    %12 = arith.maximumf %10, %11 : vector<128x128xf32>
    %cst_6 = arith.constant 0.000000e+00 : f32
    %13 = vector.broadcast %cst_6 : f32 to vector<128x128xf32>
    %14 = arith.subf %13, %8 : vector<128x128xf32>
    %15 = tpu.reciprocal %12 : vector<128x128xf32> -> vector<128x128xf32>
    %16 = arith.mulf %14, %15 : vector<128x128xf32>
    %cst_7 = arith.constant 0.000000e+00 : f32
    %17 = vector.broadcast %cst_7 : f32 to vector<128x128xf32>
    %18 = arith.cmpf olt, %8, %17 : vector<128x128xf32>
    %cst_8 = arith.constant 0.000000e+00 : f32
    %19 = vector.broadcast %cst_8 : f32 to vector<1x128xf32>
    %20 = arith.cmpf ogt, %6, %19 : vector<1x128xf32>
    %21 = vector.broadcast %20 : vector<1x128xi1> to vector<128x128xi1>
    %22 = arith.andi %18, %21 : vector<128x128xi1>
    %cst_9 = arith.constant 0.000000e+00 : f32
    %23 = vector.broadcast %cst_9 : f32 to vector<128x128xf32>
    %24 = arith.select %22, %16, %23 : vector<128x128xi1>, vector<128x128xf32>
    %cst_10 = arith.constant dense<0xFF800000> : vector<128xf32>
    %25 = vector.multi_reduction <maximumf>, %24, %cst_10 [1] : vector<128x128xf32> to vector<128xf32>
    %26 = vector.shape_cast %25 : vector<128xf32> to vector<128x1xf32>
    %27 = vector.broadcast %5 : vector<1x128xf32> to vector<128x128xf32>
    %28 = vector.broadcast %26 : vector<128x1xf32> to vector<128x128xf32>
    %29 = arith.mulf %27, %28 : vector<128x128xf32>
    %cst_11 = arith.constant 1.000000e+00 : f32
    %30 = vector.broadcast %cst_11 : f32 to vector<128x1xf32>
    %31 = arith.subf %30, %26 : vector<128x1xf32>
    %32 = vector.broadcast %31 : vector<128x1xf32> to vector<128x128xf32>
    %33 = arith.mulf %8, %32 : vector<128x128xf32>
    %34 = arith.addf %29, %33 : vector<128x128xf32>
    %c0_12 = arith.constant 0 : index
    %c0_13 = arith.constant 0 : index
    %35 = vector.load %arg4[%c0_12, %c0_13] : memref<128x128xf32, #tpu.memory_space<vmem>>, vector<128x128xf32>
    tpu.vector_store %arg4[%c0_12, %c0_13], %34 {strides = array<i32>} : memref<128x128xf32, #tpu.memory_space<vmem>>, vector<128x128xf32>,
    return
  }
  func.func @transform_0(%arg0: i32) -> (i32, i32) {
    %c0_i32 = arith.constant 0 : i32
    %c0_i32_0 = arith.constant 0 : i32
    return %arg0, %c0_i32 : i32, i32
  }
  func.func @transform_1(%arg0: i32) -> (i32, i32) {
    %c0_i32 = arith.constant 0 : i32
    %c0_i32_0 = arith.constant 0 : i32
    %c0_i32_1 = arith.constant 0 : i32
    return %c0_i32, %c0_i32_0 : i32, i32
  }
  func.func @transform_2(%arg0: i32) -> (i32, i32) {
    %c0_i32 = arith.constant 0 : i32
    %c0_i32_0 = arith.constant 0 : i32
    %c0_i32_1 = arith.constant 0 : i32
    return %c0_i32, %c0_i32_0 : i32, i32
  }
  func.func @transform_3(%arg0: i32) -> (i32, i32) {
    %c0_i32 = arith.constant 0 : i32
    %c0_i32_0 = arith.constant 0 : i32
    return %arg0, %c0_i32 : i32, i32
  }
}

</mosaic_0001>

<llo_original>
// kernel: ldrpm_forward.1
$region0: #{ldrpm_forward.1}
  #allocation0 [shape = 'u32[]', space=smem, size = 0x4, offset = 0x4, fixed_abs, tag = 'smem constant byte address 0x4 - core index']
  #allocation1 [shape = 'u32[144,128]{1,0:T(1,128)}', space=vmem, size = 0x12000, scoped, tag = 'internal scratch']
  %s0 = inlined_call_operand.vmem [shape: bf16[256,128], index: 0, kind: input, shape index: {}]
  %s1 = inlined_call_operand.vmem [shape: bf16[128,128], index: 1, kind: input, shape index: {}]
  %s2 = inlined_call_operand.vmem [shape: f32[3,128], index: 2, kind: input, shape index: {}]
  %s3 = inlined_call_operand.hbm [shape: f32[256,128], index: 3, kind: output, shape index: {}]
  %s4 = sld [smem:[#allocation0]]
  $region45: #{ldrpm_forward.1} parent=0
    _
  %s6 = ssub.s32 1, %s4
  %s7 = scalar_select 0, %s6, %s4
  $region1: #{ldrpm_forward.1} parent=0
    #allocation2 [shape = 'u8[131072]{0}', space=vmem, size = 0x20000, scoped, tag = 'output window, operand 0']
    #allocation3 [shape = 's32[2]{0}', space=sflag, size = 0x8, scoped, tag = 'scoped memory for ldrpm_forward.1']
    %8 = vsyncpa [#allocation3], 0
    %s9 = scalar_lea.sflag [#allocation3], 1
    %10 = vsyncpa %s9, 0
    loop: start=0, step=1, limit=4
    $region2: #{ldrpm_forward.1} parent=1 // loop_pre_header
      _
    $region3: #{ldrpm_forward.1} parent=1 // loop_header
      %s12 = sphi 0, %s16
      %p13 = scmp.ge.s32.totalorder %s12, 4
      %s22 = sphi 0, %s24
      %s25 = sphi 0, %s22
      %s26 = sphi 0, %s25
      %s42 = sphi 0, %s26
      %s46 = sphi 0, %s46
      %s48 = sphi 0, %s46
      %s49 = sphi 0, %s48
      %s63 = sphi 0, %s49
      %s67 = sphi 0, %s67
      %s69 = sphi 0, %s67
      %s70 = sphi 0, %s69
      %s84 = sphi 0, %s70
      %s90 = sphi 0, %s92
      %s93 = sphi 0, %s90
      %s94 = sphi 0, %s93
      %s110 = sphi 0, %s94
    $region4: #{ldrpm_forward.1} parent=1 // loop_header_branch
      %15 = sbr.rel (%p13) target = $region8
    $region5: #{ldrpm_forward.1} parent=1 // loop_body
      %s17 = ssub.s32 %s12, 1
      %s18 = ssub.s32 %s12, 2
      %s19 = sadd.s32 %s12, 1
      %s20 = ssub.s32 %s12, %s19
      %p21 = scmp.eq.s32.totalorder %s20, 0
      %s23 = sadd.s32 %s22, 1
      %s24 = scalar_select %p21, %s22, %s23
      %p27 = pneg %p21
      %p28 = scmp.eq.s32.totalorder %s12, 1
      %p29 = por %p27, %p28
      %p30 = scmp.ne.s32.totalorder %s22, %s25
      %p31 = scmp.eq.s32.totalorder %s12, 0
      %p32 = por %p30, %p31
      %p33 = scmp.ne.s32.totalorder %s22, %s25
      %p34 = scmp.eq.s32.totalorder %s17, 1
      %p35 = por %p33, %p34
      %p36 = scmp.ne.s32.totalorder %s25, %s26
      %p37 = scmp.eq.s32.totalorder %s17, 0
      %p38 = por %p36, %p37
      %p39 = scmp.ne.s32.totalorder %s25, %s26
      %p40 = scmp.eq.s32.totalorder %s18, 1
      %p41 = por %p39, %p40
      %p43 = scmp.ne.s32.totalorder %s26, %s42
      %p44 = scmp.eq.s32.totalorder %s18, 0
      %p45 = por %p43, %p44
      %s47 = sadd.s32 %s46, 1
      %p50 = scmp.eq.s32.totalorder %s12, 1
      %p51 = scmp.ne.s32.totalorder %s46, %s48
      %p52 = scmp.eq.s32.totalorder %s12, 0
      %p53 = por %p51, %p52
      %p54 = scmp.ne.s32.totalorder %s46, %s48
      %p55 = scmp.eq.s32.totalorder %s17, 1
      %p56 = por %p54, %p55
      %p57 = scmp.ne.s32.totalorder %s48, %s49
      %p58 = scmp.eq.s32.totalorder %s17, 0
      %p59 = por %p57, %p58
      %p60 = scmp.ne.s32.totalorder %s48, %s49
      %p61 = scmp.eq.s32.totalorder %s18, 1
      %p62 = por %p60, %p61
      %p64 = scmp.ne.s32.totalorder %s49, %s63
      %p65 = scmp.eq.s32.totalorder %s18, 0
      %p66 = por %p64, %p65
      %s68 = sadd.s32 %s67, 1
      %p71 = scmp.eq.s32.totalorder %s12, 1
      %p72 = scmp.ne.s32.totalorder %s67, %s69
      %p73 = scmp.eq.s32.totalorder %s12, 0
      %p74 = por %p72, %p73
      %p75 = scmp.ne.s32.totalorder %s67, %s69
      %p76 = scmp.eq.s32.totalorder %s17, 1
      %p77 = por %p75, %p76
      %p78 = scmp.ne.s32.totalorder %s69, %s70
      %p79 = scmp.eq.s32.totalorder %s17, 0
      %p80 = por %p78, %p79
      %p81 = scmp.ne.s32.totalorder %s69, %s70
      %p82 = scmp.eq.s32.totalorder %s18, 1
      %p83 = por %p81, %p82
      %p85 = scmp.ne.s32.totalorder %s70, %s84
      %p86 = scmp.eq.s32.totalorder %s18, 0
      %p87 = por %p85, %p86
      %s88 = ssub.s32 %s12, %s19
      %p89 = scmp.eq.s32.totalorder %s88, 0
      %s91 = sadd.s32 %s90, 1
      %s92 = scalar_select %p89, %s90, %s91
      %p95 = pneg %p89
      %p96 = scmp.eq.s32.totalorder %s12, 1
      %p97 = por %p95, %p96
      %p98 = scmp.ne.s32.totalorder %s90, %s93
      %p99 = scmp.eq.s32.totalorder %s12, 0
      %p100 = por %p98, %p99
      %p101 = scmp.ne.s32.totalorder %s90, %s93
      %p102 = scmp.eq.s32.totalorder %s17, 1
      %p103 = por %p101, %p102
      %p104 = scmp.ne.s32.totalorder %s93, %s94
      %p105 = scmp.eq.s32.totalorder %s17, 0
      %p106 = por %p104, %p105
      %p107 = scmp.ne.s32.totalorder %s93, %s94
      %p108 = scmp.eq.s32.totalorder %s18, 1
      %p109 = por %p107, %p108
      %p111 = scmp.ne.s32.totalorder %s94, %s110
      %p112 = scmp.eq.s32.totalorder %s18, 0
      %p113 = por %p111, %p112
      %p114 = scmp.le.s32.totalorder 1, %s12
      %p115 = scmp.lt.s32.totalorder %s12, 3
      %p116 = pnand %p114, %p115
      %p117 = pneg %p116
      // Predicated region
      $region9: #{ldrpm_forward.1} parent=5 // pred_check
        _
      $region10: #{ldrpm_forward.1} parent=5 // pred_check_branch
        %119 = sbr.rel (%p116) target = $region12
      $region11: #{ldrpm_forward.1} parent=5 // pred_region
        %s120 = ssub.s32 %s12, 1
        // Predicated region
        $region13: #{ldrpm_forward.1} parent=11 // pred_check
          %p121 = pneg %p59
        $region14: #{ldrpm_forward.1} parent=11 // pred_check_branch
          %123 = sbr.rel (%p121) target = $region16
        $region15: #{ldrpm_forward.1} parent=11 // pred_region
          _
        $region16: #{ldrpm_forward.1} parent=11 // pred_fallthru
          _
        // Predicated region
        $region17: #{ldrpm_forward.1} parent=11 // pred_check
          %p124 = pneg %p80
        $region18: #{ldrpm_forward.1} parent=11 // pred_check_branch
          %126 = sbr.rel (%p124) target = $region20
        $region19: #{ldrpm_forward.1} parent=11 // pred_region
          _
        $region20: #{ldrpm_forward.1} parent=11 // pred_fallthru
          _
      $region12: #{ldrpm_forward.1} parent=5 // pred_fallthru
        _
      %p127 = scmp.lt.s32.totalorder %s12, 2
      // Predicated region
      $region21: #{ldrpm_forward.1} parent=5 // pred_check
        %p128 = pneg %p127
      $region22: #{ldrpm_forward.1} parent=5 // pred_check_branch
        %130 = sbr.rel (%p128) target = $region24
      $region23: #{ldrpm_forward.1} parent=5 // pred_region
        // Predicated region
        $region25: #{ldrpm_forward.1} parent=23 // pred_check
          %p131 = pneg %p32
        $region26: #{ldrpm_forward.1} parent=23 // pred_check_branch
          %133 = sbr.rel (%p131) target = $region28
        $region27: #{ldrpm_forward.1} parent=23 // pred_region
          %s134 = smul.u32 16, %s12
          %p135 = scmp.lt.s32.totalorder %s134, 31
          %s136 = scalar_select %p135, %s134, 31
          %s137 = smul.addr %s136, 4
          %s138 = scalar_lea.vmem %s0, %s137
          %s139 = smul.u32 16, %s12
        $region28: #{ldrpm_forward.1} parent=23 // pred_fallthru
          _
      $region24: #{ldrpm_forward.1} parent=5 // pred_fallthru
        _
      %p140 = scmp.le.s32.totalorder 1, %s12
      %p141 = scmp.lt.s32.totalorder %s12, 3
      %p142 = pnand %p140, %p141
      %p143 = pneg %p142
      // Predicated region
      $region29: #{ldrpm_forward.1} parent=5 // pred_check
        _
      $region30: #{ldrpm_forward.1} parent=5 // pred_check_branch
        %145 = sbr.rel (%p142) target = $region32
      $region31: #{ldrpm_forward.1} parent=5 // pred_region
        %s146 = ssub.s32 %s12, 1
        %s147 = smul.u32 16, %s17
        %p148 = scmp.lt.s32.totalorder %s147, 31
        %s149 = scalar_select %p148, %s147, 31
        %s150 = smul.addr %s149, 4
        %s151 = scalar_lea.vmem %s0, %s150
        %p152 = pneg %p38
        %p153 = pneg %p35
        %p154 = pneg %p59
        %p155 = pneg %p56
        %p156 = pneg %p80
        %p157 = pneg %p77
        %p158 = pneg %p106
        %p159 = pneg %p103
        %s160 = sand.u32 %s93, 1
        %s161 = scalar_lea.sflag [#allocation3], %s160
        %s162 = sand.u32 %s93, 1
        %s163 = smul.addr %s162, 128
        %s164 = scalar_lea.vmem [#allocation2], %s163
        %s165 = smul.u32 16, %s17
        %p166 = scmp.lt.s32.totalorder %s165, 31
        %s167 = scalar_select %p166, %s165, 31
        %s168 = smul.addr %s167, 4
        %s169 = scalar_lea.vmem %s0, %s168
        %s170 = smul.u32 16, %s17
        %s171 = smul.u32 16, %s17
        %v173 = vld [vmem:[%s169] sm:$0xf]
        %v174 = vld [vmem:[%s169 + $0x4] sm:$0xf]
        %v175 = vld [vmem:[%s169 + $0x8] sm:$0xf]
        %v176 = vld [vmem:[%s169 + $0xc] sm:$0xf]
        %v177 = vld [vmem:[%s169 + $0x10] sm:$0xf]
        %v178 = vld [vmem:[%s169 + $0x14] sm:$0xf]
        %v179 = vld [vmem:[%s169 + $0x18] sm:$0xf]
        %v180 = vld [vmem:[%s169 + $0x1c] sm:$0xf]
        %v181 = vld [vmem:[%s169 + $0x20] sm:$0xf]
        %v182 = vld [vmem:[%s169 + $0x24] sm:$0xf]
        %v183 = vld [vmem:[%s169 + $0x28] sm:$0xf]
        %v184 = vld [vmem:[%s169 + $0x2c] sm:$0xf]
        %v185 = vld [vmem:[%s169 + $0x30] sm:$0xf]
        %v186 = vld [vmem:[%s169 + $0x34] sm:$0xf]
        %v187 = vld [vmem:[%s169 + $0x38] sm:$0xf]
        %v188 = vld [vmem:[%s169 + $0x3c] sm:$0xf]
        %v189 = vld [vmem:[%s1] sm:$0xf]
        %v190 = vld [vmem:[%s1 + $0x4] sm:$0xf]
        %v191 = vld [vmem:[%s1 + $0x8] sm:$0xf]
        %v192 = vld [vmem:[%s1 + $0xc] sm:$0xf]
        %v193 = vld [vmem:[%s1 + $0x10] sm:$0xf]
        %v194 = vld [vmem:[%s1 + $0x14] sm:$0xf]
        %v195 = vld [vmem:[%s1 + $0x18] sm:$0xf]
        %v196 = vld [vmem:[%s1 + $0x1c] sm:$0xf]
        %v197 = vld [vmem:[%s1 + $0x20] sm:$0xf]
        %v198 = vld [vmem:[%s1 + $0x24] sm:$0xf]
        %v199 = vld [vmem:[%s1 + $0x28] sm:$0xf]
        %v200 = vld [vmem:[%s1 + $0x2c] sm:$0xf]
        %v201 = vld [vmem:[%s1 + $0x30] sm:$0xf]
        %v202 = vld [vmem:[%s1 + $0x34] sm:$0xf]
        %v203 = vld [vmem:[%s1 + $0x38] sm:$0xf]
        %v204 = vld [vmem:[%s1 + $0x3c] sm:$0xf]
        %v205 = vld [vmem:[%s2] sm:$0x7]
        %v206 = vlaneseq
        %v207 = vshrl.u32 %v206, 7
        %v208 = vsub.s32 0, %v207
        %v209 = vrot.slane %v205, %v208
        %v226 = vunpack.c.l.b16 %v173
        %v227 = vunpack.c.l.b16 %v174
        %v228 = vunpack.c.l.b16 %v175
        %v229 = vunpack.c.l.b16 %v176
        %v230 = vunpack.c.l.b16 %v177
        %v231 = vunpack.c.l.b16 %v178
        %v232 = vunpack.c.l.b16 %v179
        %v233 = vunpack.c.l.b16 %v180
        %v234 = vunpack.c.l.b16 %v181
        %v235 = vunpack.c.l.b16 %v182
        %v236 = vunpack.c.l.b16 %v183
        %v237 = vunpack.c.l.b16 %v184
        %v238 = vunpack.c.l.b16 %v185
        %v239 = vunpack.c.l.b16 %v186
        %v240 = vunpack.c.l.b16 %v187
        %v241 = vunpack.c.l.b16 %v188
        %v242 = vpack.c.b16 %v227, %v226
        %v243 = vpack.c.b16 %v229, %v228
        %v244 = vpack.c.b16 %v231, %v230
        %v245 = vpack.c.b16 %v233, %v232
        %v246 = vpack.c.b16 %v235, %v234
        %v247 = vpack.c.b16 %v237, %v236
        %v248 = vpack.c.b16 %v239, %v238
        %v249 = vpack.c.b16 %v241, %v240
        %v274 = vunpack.c.l.b16 %v189
        %v275 = vunpack.c.l.b16 %v190
        %v276 = vunpack.c.l.b16 %v191
        %v277 = vunpack.c.l.b16 %v192
        %v278 = vunpack.c.l.b16 %v193
        %v279 = vunpack.c.l.b16 %v194
        %v280 = vunpack.c.l.b16 %v195
        %v281 = vunpack.c.l.b16 %v196
        %v282 = vunpack.c.l.b16 %v197
        %v283 = vunpack.c.l.b16 %v198
        %v284 = vunpack.c.l.b16 %v199
        %v285 = vunpack.c.l.b16 %v200
        %v286 = vunpack.c.l.b16 %v201
        %v287 = vunpack.c.l.b16 %v202
        %v288 = vunpack.c.l.b16 %v203
        %v289 = vunpack.c.l.b16 %v204
        %v290 = vpack.c.b16 %v275, %v274
        %v291 = vpack.c.b16 %v277, %v276
        %v292 = vpack.c.b16 %v279, %v278
        %v293 = vpack.c.b16 %v281, %v280
        %v294 = vpack.c.b16 %v283, %v282
        %v295 = vpack.c.b16 %v285, %v284
        %v296 = vpack.c.b16 %v287, %v286
        %v297 = vpack.c.b16 %v289, %v288
        %306 = vmatprep.subr.bf16.mxu0 0
        %307 = vmatpush1.bf16.msra.mxu0 %v297
        %308 = vmatprep.subr.bf16.mxu0 0
        %309 = vmatpush1.bf16.msra.mxu0 %v296
        %310 = vmatprep.subr.bf16.mxu0 0
        %311 = vmatpush1.bf16.msra.mxu0 %v295
        %312 = vmatprep.subr.bf16.mxu0 0
        %313 = vmatpush1.bf16.msra.mxu0 %v294
        %314 = vmatprep.subr.bf16.mxu0 0
        %315 = vmatpush1.bf16.msra.mxu0 %v293
        %316 = vmatprep.subr.bf16.mxu0 0
        %317 = vmatpush1.bf16.msra.mxu0 %v292
        %318 = vmatprep.subr.bf16.mxu0 0
        %319 = vmatpush1.bf16.msra.mxu0 %v291
        %320 = vmatprep.subr.bf16.mxu0 0
        %321 = vmatpush1.bf16.msra.mxu0 %v290
        %322 = vmatprep.subr.bf16.mxu0 0
        %323 = vmatpush2.bf16.msra.mxu0 0
        %324 = vmatprep.subr.bf16.mxu0 0
        %325 = vmatpush2.bf16.msra.mxu0 0
        %326 = vmatprep.subr.bf16.mxu0 0
        %327 = vmatpush2.bf16.msra.mxu0 0
        %328 = vmatprep.subr.bf16.mxu0 0
        %329 = vmatpush2.bf16.msra.mxu0 0
        %330 = vmatprep.subr.bf16.mxu0 0
        %331 = vmatpush2.bf16.msra.mxu0 0
        %332 = vmatprep.subr.bf16.mxu0 0
        %333 = vmatpush2.bf16.msra.mxu0 0
        %334 = vmatprep.subr.bf16.mxu0 0
        %335 = vmatpush2.bf16.msra.mxu0 0
        %336 = vmatprep.subr.bf16.mxu0 0
        %337 = vmatpush2.bf16.msra.mxu0 0
        %338 = vmatprep.mubr.bf16.mxu0 0
        %339 = vmatmul.mubr.bf16.gmra.mxu0 %v242
        %v340 = vpop.f32.mrf.mxu0
        %v341 = vadd.f32 %v209, %v340
        %v342 = vpop.f32.mrf.mxu0
        %v343 = vpop.f32.mrf.mxu0
        %v344 = vadd.f32 %v209, %v343
        %v345 = vpop.f32.mrf.mxu0
        %346 = vmatprep.mubr.bf16.mxu0 0
        %347 = vmatmul.mubr.bf16.gmra.mxu0 %v243
        %v348 = vpop.f32.mrf.mxu0
        %v349 = vadd.f32 %v209, %v348
        %v350 = vpop.f32.mrf.mxu0
        %v351 = vpop.f32.mrf.mxu0
        %v352 = vadd.f32 %v209, %v351
        %v353 = vpop.f32.mrf.mxu0
        %354 = vmatprep.mubr.bf16.mxu0 0
        %355 = vmatmul.mubr.bf16.gmra.mxu0 %v244
        %v356 = vpop.f32.mrf.mxu0
        %v357 = vadd.f32 %v209, %v356
        %v358 = vpop.f32.mrf.mxu0
        %v359 = vpop.f32.mrf.mxu0
        %v360 = vadd.f32 %v209, %v359
        %v361 = vpop.f32.mrf.mxu0
        %362 = vmatprep.mubr.bf16.mxu0 0
        %363 = vmatmul.mubr.bf16.gmra.mxu0 %v245
        %v364 = vpop.f32.mrf.mxu0
        %v365 = vadd.f32 %v209, %v364
        %v366 = vpop.f32.mrf.mxu0
        %v367 = vpop.f32.mrf.mxu0
        %v368 = vadd.f32 %v209, %v367
        %v369 = vpop.f32.mrf.mxu0
        %370 = vmatprep.mubr.bf16.mxu0 0
        %371 = vmatmul.mubr.bf16.gmra.mxu0 %v246
        %v372 = vpop.f32.mrf.mxu0
        %v373 = vadd.f32 %v209, %v372
        %v374 = vpop.f32.mrf.mxu0
        %v375 = vpop.f32.mrf.mxu0
        %v376 = vadd.f32 %v209, %v375
        %v377 = vpop.f32.mrf.mxu0
        %378 = vmatprep.mubr.bf16.mxu0 0
        %379 = vmatmul.mubr.bf16.gmra.mxu0 %v247
        %v380 = vpop.f32.mrf.mxu0
        %v381 = vadd.f32 %v209, %v380
        %v382 = vpop.f32.mrf.mxu0
        %v383 = vpop.f32.mrf.mxu0
        %v384 = vadd.f32 %v209, %v383
        %v385 = vpop.f32.mrf.mxu0
        %386 = vmatprep.mubr.bf16.mxu0 0
        %387 = vmatmul.mubr.bf16.gmra.mxu0 %v248
        %v388 = vpop.f32.mrf.mxu0
        %v389 = vadd.f32 %v209, %v388
        %v390 = vpop.f32.mrf.mxu0
        %v391 = vpop.f32.mrf.mxu0
        %v392 = vadd.f32 %v209, %v391
        %v393 = vpop.f32.mrf.mxu0
        %394 = vmatprep.mubr.bf16.mxu0 0
        %395 = vmatmul.mubr.bf16.gmra.mxu0 %v249
        %v396 = vpop.f32.mrf.mxu0
        %v397 = vadd.f32 %v209, %v396
        %v398 = vpop.f32.mrf.mxu0
        %v399 = vpop.f32.mrf.mxu0
        %v400 = vadd.f32 %v209, %v399
        %v401 = vpop.f32.mrf.mxu0
        %402 = vdwg.mxu0
        %v403 = vlaneseq
        %v404 = vshrl.u32 %v403, 7
        %v405 = vsub.s32 1, %v404
        %v406 = vrot.slane %v205, %v405
        %v407 = vsub.f32 %v406, %v341
        %v408 = vsub.f32 %v406, %v344
        %v409 = vsub.f32 %v406, %v349
        %v410 = vsub.f32 %v406, %v352
        %v411 = vsub.f32 %v406, %v357
        %v412 = vsub.f32 %v406, %v360
        %v413 = vsub.f32 %v406, %v365
        %v414 = vsub.f32 %v406, %v368
        %v415 = vsub.f32 %v406, %v373
        %v416 = vsub.f32 %v406, %v376
        %v417 = vsub.f32 %v406, %v381
        %v418 = vsub.f32 %v406, %v384
        %v419 = vsub.f32 %v406, %v389
        %v420 = vsub.f32 %v406, %v392
        %v421 = vsub.f32 %v406, %v397
        %v422 = vsub.f32 %v406, %v400
        %v423 = vmax.f32 %v407, 1.1920929e-07
        %v424 = vmax.f32 %v408, 1.1920929e-07
        %v425 = vmax.f32 %v409, 1.1920929e-07
        %v426 = vmax.f32 %v410, 1.1920929e-07
        %v427 = vmax.f32 %v411, 1.1920929e-07
        %v428 = vmax.f32 %v412, 1.1920929e-07
        %v429 = vmax.f32 %v413, 1.1920929e-07
        %v430 = vmax.f32 %v414, 1.1920929e-07
        %v431 = vmax.f32 %v415, 1.1920929e-07
        %v432 = vmax.f32 %v416, 1.1920929e-07
        %v433 = vmax.f32 %v417, 1.1920929e-07
        %v434 = vmax.f32 %v418, 1.1920929e-07
        %v435 = vmax.f32 %v419, 1.1920929e-07
        %v436 = vmax.f32 %v420, 1.1920929e-07
        %v437 = vmax.f32 %v421, 1.1920929e-07
        %v438 = vmax.f32 %v422, 1.1920929e-07
        %v439 = vsub.f32 0.0, %v341
        %v440 = vsub.f32 0.0, %v344
        %v441 = vsub.f32 0.0, %v349
        %v442 = vsub.f32 0.0, %v352
        %v443 = vsub.f32 0.0, %v357
        %v444 = vsub.f32 0.0, %v360
        %v445 = vsub.f32 0.0, %v365
        %v446 = vsub.f32 0.0, %v368
        %v447 = vsub.f32 0.0, %v373
        %v448 = vsub.f32 0.0, %v376
        %v449 = vsub.f32 0.0, %v381
        %v450 = vsub.f32 0.0, %v384
        %v451 = vsub.f32 0.0, %v389
        %v452 = vsub.f32 0.0, %v392
        %v453 = vsub.f32 0.0, %v397
        %v454 = vsub.f32 0.0, %v400
        %v455 = vrcp.pop %v423
        %v456 = vrcp.pop %v424
        %v457 = vrcp.pop %v425
        %v458 = vrcp.pop %v426
        %v459 = vrcp.pop %v427
        %v460 = vrcp.pop %v428
        %v461 = vrcp.pop %v429
        %v462 = vrcp.pop %v430
        %v463 = vrcp.pop %v431
        %v464 = vrcp.pop %v432
        %v465 = vrcp.pop %v433
        %v466 = vrcp.pop %v434
        %v467 = vrcp.pop %v435
        %v468 = vrcp.pop %v436
        %v469 = vrcp.pop %v437
        %v470 = vrcp.pop %v438
        %v471 = vmul.f32 %v439, %v455
        %v472 = vmul.f32 %v440, %v456
        %v473 = vmul.f32 %v441, %v457
        %v474 = vmul.f32 %v442, %v458
        %v475 = vmul.f32 %v443, %v459
        %v476 = vmul.f32 %v444, %v460
        %v477 = vmul.f32 %v445, %v461
        %v478 = vmul.f32 %v446, %v462
        %v479 = vmul.f32 %v447, %v463
        %v480 = vmul.f32 %v448, %v464
        %v481 = vmul.f32 %v449, %v465
        %v482 = vmul.f32 %v450, %v466
        %v483 = vmul.f32 %v451, %v467
        %v484 = vmul.f32 %v452, %v468
        %v485 = vmul.f32 %v453, %v469
        %v486 = vmul.f32 %v454, %v470
        %vm487 = vcmp.lt.f32.partialorder %v341, 0.0
        %vm488 = vcmp.lt.f32.partialorder %v344, 0.0
        %vm489 = vcmp.lt.f32.partialorder %v349, 0.0
        %vm490 = vcmp.lt.f32.partialorder %v352, 0.0
        %vm491 = vcmp.lt.f32.partialorder %v357, 0.0
        %vm492 = vcmp.lt.f32.partialorder %v360, 0.0
        %vm493 = vcmp.lt.f32.partialorder %v365, 0.0
        %vm494 = vcmp.lt.f32.partialorder %v368, 0.0
        %vm495 = vcmp.lt.f32.partialorder %v373, 0.0
        %vm496 = vcmp.lt.f32.partialorder %v376, 0.0
        %vm497 = vcmp.lt.f32.partialorder %v381, 0.0
        %vm498 = vcmp.lt.f32.partialorder %v384, 0.0
        %vm499 = vcmp.lt.f32.partialorder %v389, 0.0
        %vm500 = vcmp.lt.f32.partialorder %v392, 0.0
        %vm501 = vcmp.lt.f32.partialorder %v397, 0.0
        %vm502 = vcmp.lt.f32.partialorder %v400, 0.0
        %vm503 = vcmp.gt.f32.partialorder %v205, 0.0
        %v504 = vsel %vm503, 1, 0
        %v505 = vlaneseq
        %v506 = vshrl.u32 %v505, 7
        %v507 = vsub.s32 2, %v506
        %v508 = vrot.slane %v504, %v507
        %vm509 = vcmp.eq.s32.totalorder %v508, 1
        %vm510 = vmand %vm487, %vm509
        %vm511 = vmand %vm488, %vm509
        %vm512 = vmand %vm489, %vm509
        %vm513 = vmand %vm490, %vm509
        %vm514 = vmand %vm491, %vm509
        %vm515 = vmand %vm492, %vm509
        %vm516 = vmand %vm493, %vm509
        %vm517 = vmand %vm494, %vm509
        %vm518 = vmand %vm495, %vm509
        %vm519 = vmand %vm496, %vm509
        %vm520 = vmand %vm497, %vm509
        %vm521 = vmand %vm498, %vm509
        %vm522 = vmand %vm499, %vm509
        %vm523 = vmand %vm500, %vm509
        %vm524 = vmand %vm501, %vm509
        %vm525 = vmand %vm502, %vm509
        %v526 = vsel %vm510, %v471, 0.0
        %v527 = vsel %vm511, %v472, 0.0
        %v528 = vsel %vm512, %v473, 0.0
        %v529 = vsel %vm513, %v474, 0.0
        %v530 = vsel %vm514, %v475, 0.0
        %v531 = vsel %vm515, %v476, 0.0
        %v532 = vsel %vm516, %v477, 0.0
        %v533 = vsel %vm517, %v478, 0.0
        %v534 = vsel %vm518, %v479, 0.0
        %v535 = vsel %vm519, %v480, 0.0
        %v536 = vsel %vm520, %v481, 0.0
        %v537 = vsel %vm521, %v482, 0.0
        %v538 = vsel %vm522, %v483, 0.0
        %v539 = vsel %vm523, %v484, 0.0
        %v540 = vsel %vm524, %v485, 0.0
        %v541 = vsel %vm525, %v486, 0.0
        %542 = vmax.xlane.f32.xlu0 %v526
        %v543 = vpop.xlane.xlu0 %542
        %544 = vmax.xlane.f32.xlu0 %v527
        %v545 = vpop.xlane.xlu0 %544
        %546 = vmax.xlane.f32.xlu0 %v528
        %v547 = vpop.xlane.xlu0 %546
        %548 = vmax.xlane.f32.xlu0 %v529
        %v549 = vpop.xlane.xlu0 %548
        %550 = vmax.xlane.f32.xlu0 %v530
        %v551 = vpop.xlane.xlu0 %550
        %552 = vmax.xlane.f32.xlu0 %v531
        %v553 = vpop.xlane.xlu0 %552
        %554 = vmax.xlane.f32.xlu0 %v532
        %v555 = vpop.xlane.xlu0 %554
        %556 = vmax.xlane.f32.xlu0 %v533
        %v557 = vpop.xlane.xlu0 %556
        %558 = vmax.xlane.f32.xlu0 %v534
        %v559 = vpop.xlane.xlu0 %558
        %560 = vmax.xlane.f32.xlu0 %v535
        %v561 = vpop.xlane.xlu0 %560
        %562 = vmax.xlane.f32.xlu0 %v536
        %v563 = vpop.xlane.xlu0 %562
        %564 = vmax.xlane.f32.xlu0 %v537
        %v565 = vpop.xlane.xlu0 %564
        %566 = vmax.xlane.f32.xlu0 %v538
        %v567 = vpop.xlane.xlu0 %566
        %568 = vmax.xlane.f32.xlu0 %v539
        %v569 = vpop.xlane.xlu0 %568
        %570 = vmax.xlane.f32.xlu0 %v540
        %v571 = vpop.xlane.xlu0 %570
        %572 = vmax.xlane.f32.xlu0 %v541
        %v573 = vpop.xlane.xlu0 %572
        %v574 = vmul.f32 %v406, %v543
        %v575 = vmul.f32 %v406, %v545
        %v576 = vmul.f32 %v406, %v547
        %v577 = vmul.f32 %v406, %v549
        %v578 = vmul.f32 %v406, %v551
        %v579 = vmul.f32 %v406, %v553
        %v580 = vmul.f32 %v406, %v555
        %v581 = vmul.f32 %v406, %v557
        %v582 = vmul.f32 %v406, %v559
        %v583 = vmul.f32 %v406, %v561
        %v584 = vmul.f32 %v406, %v563
        %v585 = vmul.f32 %v406, %v565
        %v586 = vmul.f32 %v406, %v567
        %v587 = vmul.f32 %v406, %v569
        %v588 = vmul.f32 %v406, %v571
        %v589 = vmul.f32 %v406, %v573
        %v590 = vsub.f32 1.0, %v543
        %v591 = vsub.f32 1.0, %v545
        %v592 = vsub.f32 1.0, %v547
        %v593 = vsub.f32 1.0, %v549
        %v594 = vsub.f32 1.0, %v551
        %v595 = vsub.f32 1.0, %v553
        %v596 = vsub.f32 1.0, %v555
        %v597 = vsub.f32 1.0, %v557
        %v598 = vsub.f32 1.0, %v559
        %v599 = vsub.f32 1.0, %v561
        %v600 = vsub.f32 1.0, %v563
        %v601 = vsub.f32 1.0, %v565
        %v602 = vsub.f32 1.0, %v567
        %v603 = vsub.f32 1.0, %v569
        %v604 = vsub.f32 1.0, %v571
        %v605 = vsub.f32 1.0, %v573
        %v606 = vmul.f32 %v341, %v590
        %v607 = vmul.f32 %v344, %v591
        %v608 = vmul.f32 %v349, %v592
        %v609 = vmul.f32 %v352, %v593
        %v610 = vmul.f32 %v357, %v594
        %v611 = vmul.f32 %v360, %v595
        %v612 = vmul.f32 %v365, %v596
        %v613 = vmul.f32 %v368, %v597
        %v614 = vmul.f32 %v373, %v598
        %v615 = vmul.f32 %v376, %v599
        %v616 = vmul.f32 %v381, %v600
        %v617 = vmul.f32 %v384, %v601
        %v618 = vmul.f32 %v389, %v602
        %v619 = vmul.f32 %v392, %v603
        %v620 = vmul.f32 %v397, %v604
        %v621 = vmul.f32 %v400, %v605
        %v622 = vadd.f32 %v574, %v606
        %v623 = vadd.f32 %v575, %v607
        %v624 = vadd.f32 %v576, %v608
        %v625 = vadd.f32 %v577, %v609
        %v626 = vadd.f32 %v578, %v610
        %v627 = vadd.f32 %v579, %v611
        %v628 = vadd.f32 %v580, %v612
        %v629 = vadd.f32 %v581, %v613
        %v630 = vadd.f32 %v582, %v614
        %v631 = vadd.f32 %v583, %v615
        %v632 = vadd.f32 %v584, %v616
        %v633 = vadd.f32 %v585, %v617
        %v634 = vadd.f32 %v586, %v618
        %v635 = vadd.f32 %v587, %v619
        %v636 = vadd.f32 %v588, %v620
        %v637 = vadd.f32 %v589, %v621
        %638 = vst [vmem:[%s164] sm:$0xff] %v622
        %639 = vst [vmem:[%s164 + $0x8] sm:$0xff] %v623
        %640 = vst [vmem:[%s164 + $0x10] sm:$0xff] %v624
        %641 = vst [vmem:[%s164 + $0x18] sm:$0xff] %v625
        %642 = vst [vmem:[%s164 + $0x20] sm:$0xff] %v626
        %643 = vst [vmem:[%s164 + $0x28] sm:$0xff] %v627
        %644 = vst [vmem:[%s164 + $0x30] sm:$0xff] %v628
        %645 = vst [vmem:[%s164 + $0x38] sm:$0xff] %v629
        %646 = vst [vmem:[%s164 + $0x40] sm:$0xff] %v630
        %647 = vst [vmem:[%s164 + $0x48] sm:$0xff] %v631
        %648 = vst [vmem:[%s164 + $0x50] sm:$0xff] %v632
        %649 = vst [vmem:[%s164 + $0x58] sm:$0xff] %v633
        %650 = vst [vmem:[%s164 + $0x60] sm:$0xff] %v634
        %651 = vst [vmem:[%s164 + $0x68] sm:$0xff] %v635
        %652 = vst [vmem:[%s164 + $0x70] sm:$0xff] %v636
        %653 = vst [vmem:[%s164 + $0x78] sm:$0xff] %v637
        %s654 = sand.u32 %s93, 1
        %s655 = scalar_lea.sflag [#allocation3], %s654
        %s656 = sand.u32 %s93, 1
        %s657 = smul.addr %s656, 128
        %s658 = scalar_lea.vmem [#allocation2], %s657
        // Predicated region
        $region33: #{ldrpm_forward.1} parent=31 // pred_check
          %p659 = pneg %p103
        $region34: #{ldrpm_forward.1} parent=31 // pred_check_branch
          %661 = sbr.rel (%p659) target = $region36
        $region35: #{ldrpm_forward.1} parent=31 // pred_region
          %s662 = smul.u32 16, %s17
          %s664 = ssub.s32 2048, 2048
          %665 = vsyncadd %s655, %s664
          %s666 = smul.addr %s662, 128
          %s667 = scalar_lea.hbm %s3, %s666
          %s668 = sshll.u32 %s658, 4
          %s669 = int_to_ptr.vmem [resolvable:$true] %s668
          %674 = dma.vmem_to_hbm [thread:$0]  %s669, 2048, %s667, %s655, 128, 128, 8
        $region36: #{ldrpm_forward.1} parent=31 // pred_fallthru
          _
      $region32: #{ldrpm_forward.1} parent=5 // pred_fallthru
        _
      %p675 = scmp.le.s32.totalorder 2, %s12
      // Predicated region
      $region37: #{ldrpm_forward.1} parent=5 // pred_check
        %p676 = pneg %p675
      $region38: #{ldrpm_forward.1} parent=5 // pred_check_branch
        %678 = sbr.rel (%p676) target = $region40
      $region39: #{ldrpm_forward.1} parent=5 // pred_region
        %s679 = ssub.s32 %s12, 2
        // Predicated region
        $region41: #{ldrpm_forward.1} parent=39 // pred_check
          %p680 = pneg %p109
        $region42: #{ldrpm_forward.1} parent=39 // pred_check_branch
          %682 = sbr.rel (%p680) target = $region44
        $region43: #{ldrpm_forward.1} parent=39 // pred_region
          %s683 = sand.u32 %s94, 1
          %s684 = scalar_lea.sflag [#allocation3], %s683
          %s685 = sand.u32 %s94, 1
          %s686 = smul.addr %s685, 128
          %s687 = scalar_lea.vmem [#allocation2], %s686
          %688 = dma.done %s684, 2048
        $region44: #{ldrpm_forward.1} parent=39 // pred_fallthru
          _
      $region40: #{ldrpm_forward.1} parent=5 // pred_fallthru
        _
    $region6: #{ldrpm_forward.1} parent=1 // loop_footer
      %s16 = sadd.s32 1, %s12
    $region7: #{ldrpm_forward.1} parent=1 // loop_footer_branch
      %11 = sbr.rel target = $region3
    $region8: #{ldrpm_forward.1} parent=1 // loop_exit
      _
    %689 = vsyncpa [#allocation3], 1
    %s690 = scalar_lea.sflag [#allocation3], 1
    %691 = vsyncpa %s690, 1

</llo_original>
